<compile_context>
chip_gen: v5e
topology: v5e:2x2
jax: 0.10.0
libtpu: 0.0.40
codegen_flags: <defaults>
</compile_context>

<pallas_src>
import functools

import jax
import jax.numpy as jnp
from jax.experimental import pallas as pl
from jax.experimental.pallas import tpu as pltpu


def _cdiv(a, b):
    return -(-a // b)


def _round_up(x, m):
    return ((x + m - 1) // m) * m


# ---------------------------------------------------------------------------
# Kernels
# ---------------------------------------------------------------------------

def _sc_single_kernel(s_ref, d_ref, o_ref):
    """Whole K fits in one tile: single MXU call, no reduction machinery."""
    o_ref[...] = jnp.dot(
        s_ref[...], d_ref[...], preferred_element_type=jnp.float32
    ).astype(o_ref.dtype)


def _sc_single_kernel_bias(s_ref, d_ref, b_ref, o_ref):
    acc = jnp.dot(s_ref[...], d_ref[...], preferred_element_type=jnp.float32)
    o_ref[...] = (acc + b_ref[...].astype(jnp.float32)).astype(o_ref.dtype)


def _sc_ktiled_kernel(s_ref, d_ref, o_ref):
    """K-tiled: first partial product is stored directly (no zero-init pass)."""
    k = pl.program_id(2)
    part = jnp.dot(s_ref[...], d_ref[...], preferred_element_type=jnp.float32)

    @pl.when(k == 0)
    def _():
        o_ref[...] = part

    @pl.when(k > 0)
    def _():
        o_ref[...] += part


def _sc_ktiled_kernel_bias(s_ref, d_ref, b_ref, o_ref):
    k = pl.program_id(2)
    part = jnp.dot(s_ref[...], d_ref[...], preferred_element_type=jnp.float32)

    @pl.when(k == 0)
    def _():
        o_ref[...] = part

    @pl.when(k > 0)
    def _():
        o_ref[...] += part

    @pl.when(k == pl.num_programs(2) - 1)
    def _():
        o_ref[...] += b_ref[...].astype(jnp.float32)  # (1, tn) broadcasts over tm


# ---------------------------------------------------------------------------
# Tile selection
# ---------------------------------------------------------------------------

def _select_tiles(B, H, I):
    """Pick (tm, tn, tk, Hp).  Only H may need padding (to Hp)."""
    tm_cap, tn_cap, tk_cap = 512, 1024, 1024

    # M: full block when B <= cap (no tail); otherwise 512, which is already a
    # multiple of the widest native sublane packing (32 for int8/fp8, 16 bf16).
    tm = B if B <= tm_cap else tm_cap
    # N: full block when I <= cap; otherwise 1024 (lane-dense, mult of 128),
    # tails handled by Pallas partial blocks.
    tn = I if I <= tn_cap else tn_cap

    # K: prefer tk == H (no reduction grid) or a multiple-of-128 divisor of H
    # (no K tail -> no padding).  Fall back to zero-padding H (rare).
    if H <= tk_cap:
        tk, Hp = H, H
    else:
        tk = 0
        for cand in range(tk_cap, 127, -128):
            if H % cand == 0:
                tk = cand
                break
        if tk:
            Hp = H
        else:
            tk = 512
            Hp = _round_up(H, tk)

    # v7x has 2 TensorCores: expose >= 2 parallel output tiles when we can do
    # so without breaking the (8, 128) block-shape rules.
    if _cdiv(B, tm) * _cdiv(I, tn) < 2:
        if tn % 256 == 0:
            tn //= 2
        elif tm % 16 == 0:
            tm //= 2

    return tm, tn, tk, Hp


# ---------------------------------------------------------------------------
# Wrapper
# ---------------------------------------------------------------------------

@functools.partial(jax.jit, static_argnames=("use_bias", "compute_dtype"))
def sparse_coding_forward(S, D, bias=None, *, use_bias=False,
                          compute_dtype=jnp.bfloat16):
    """Pallas implementation of SparseCoding.forward: S @ D (+ bias).

    compute_dtype: MXU input dtype (default bf16; pass None to use the inputs'
    own dtype).  Accumulation is always f32 and the output is f32.  If D is
    already stored in compute_dtype (see init_sparse_coding_params) no per-call
    cast of D is emitted.
    """
    B, H = S.shape
    H2, I = D.shape
    assert H == H2, "hidden_dim mismatch"

    if compute_dtype is not None:
        cdt = jnp.dtype(compute_dtype)
        if S.dtype != cdt:
            S = S.astype(cdt)
        if D.dtype != cdt:
            D = D.astype(cdt)

    tm, tn, tk, Hp = _select_tiles(B, H, I)

    # Zero-pad ONLY the contraction dim (rare fallback); garbage in a partial
    # K block would corrupt the reduction, whereas M/N tails are safely handled
    # by Pallas partial blocks (no wrapper-side pad or output slice passes).
    if Hp != H:
        S = jnp.pad(S, ((0, 0), (0, Hp - H)))
        D = jnp.pad(D, ((0, Hp - H), (0, 0)))

    args = [S, D]
    if use_bias:
        args.append(bias.astype(jnp.float32).reshape(1, I))

    gm, gn, gk = _cdiv(B, tm), _cdiv(I, tn), Hp // tk
    out_shape = jax.ShapeDtypeStruct((B, I), jnp.float32)

    s_bytes = jnp.dtype(S.dtype).itemsize
    d_bytes = jnp.dtype(D.dtype).itemsize
    cost = pl.CostEstimate(
        flops=2 * B * Hp * I,
        transcendentals=0,
        bytes_accessed=B * Hp * s_bytes + Hp * I * d_bytes + B * I * 4,
    )

    if gk == 1:
        # No K reduction: simplest kernel, 2-D parallel grid.
        grid = (gm, gn)
        in_specs = [
            pl.BlockSpec((tm, tk), lambda i, j: (i, 0)),
            pl.BlockSpec((tk, tn), lambda i, j: (0, j)),
        ]
        if use_bias:
            in_specs.append(pl.BlockSpec((1, tn), lambda i, j: (0, j)))
            kernel = _sc_single_kernel_bias
        else:
            kernel = _sc_single_kernel
        out_spec = pl.BlockSpec((tm, tn), lambda i, j: (i, j))
        dims = ("parallel", "parallel")
    else:
        # K-tiled reduction; output block is K-resident (index_map ignores k),
        # accumulated directly in f32 (no scratch).
        grid = (gm, gn, gk)
        in_specs = [
            pl.BlockSpec((tm, tk), lambda i, j, k: (i, k)),
            pl.BlockSpec((tk, tn), lambda i, j, k: (k, j)),
        ]
        if use_bias:
            in_specs.append(pl.BlockSpec((1, tn), lambda i, j, k: (0, j)))
            kernel = _sc_ktiled_kernel_bias
        else:
            kernel = _sc_ktiled_kernel
        out_spec = pl.BlockSpec((tm, tn), lambda i, j, k: (i, j))
        dims = ("parallel", "parallel", "arbitrary")

    return pl.pallas_call(
        kernel,
        out_shape=out_shape,
        grid_spec=pltpu.PrefetchScalarGridSpec(
            num_scalar_prefetch=0,
            grid=grid,
            in_specs=in_specs,
            out_specs=out_spec,
        ),
        compiler_params=pltpu.CompilerParams(
            dimension_semantics=dims,
            # Worst-case double-buffered working set here is ~17-21 MiB (f32
            # tiles), so 32 MiB suffices everywhere: raises v5e's 16 MiB scoped
            # default and stays within v7x's 64 MiB physical VMEM.
            vmem_limit_bytes=32 * 1024 * 1024,
        ),
        cost_estimate=cost,
    )(*args)


def init_sparse_coding_params(input_dim, hidden_dim, use_bias=False,
                              seed=20240625, param_dtype=jnp.bfloat16):
    """Shape-faithful init: D ~ N(0,1) (cast ONCE to param_dtype so the
    forward never re-casts it per call), bias = zeros (f32)."""
    key = jax.random.PRNGKey(seed + 42)
    D = jax.random.normal(key, (hidden_dim, input_dim), dtype=jnp.float32)
    D = D.astype(param_dtype)
    bias = jnp.zeros((input_dim,), dtype=jnp.float32) if use_bias else None
    return D, bias


if __name__ == "__main__":
    key = jax.random.PRNGKey(0)
    k_small, k_med_s, k_med_d = jax.random.split(key, 3)

    # ---- 1) Small shapes matching the module example (single-tile path) ----
    batch, hidden_dim, input_dim = 8, 32, 64
    S = jax.random.normal(k_small, (batch, hidden_dim), dtype=jnp.float32)

    # f32 path (compute_dtype=None) against an fp32 reference.
    D32, bias = init_sparse_coding_params(input_dim, hidden_dim, use_bias=True,
                                          param_dtype=jnp.float32)
    X_ = sparse_coding_forward(S, D32, bias, use_bias=True, compute_dtype=None)
    X_ = jax.block_until_ready(X_)
    X_ref = jnp.dot(S, D32, precision=jax.lax.Precision.HIGHEST) + bias
    assert X_.shape == (batch, input_dim)
    assert jnp.allclose(X_, X_ref, atol=1e-3, rtol=1e-3), "small f32 mismatch"

    # Default bf16-compute path (D held as a persistent bf16 parameter).
    Dbf, bias2 = init_sparse_coding_params(input_dim, hidden_dim, use_bias=True)
    Xb = sparse_coding_forward(S, Dbf, bias2, use_bias=True)
    Xb = jax.block_until_ready(Xb)
    Xb_ref = jnp.dot(
        S.astype(jnp.bfloat16).astype(jnp.float32),
        Dbf.astype(jnp.float32),
        precision=jax.lax.Precision.HIGHEST,
    ) + bias2
    assert jnp.allclose(Xb, Xb_ref, atol=1e-2, rtol=1e-2), "small bf16 mismatch"

    # ---- 2) Medium shapes exercising K-tiling (tk=768 divides H) and an
    #         N tail block (I=1152 -> tn=1024 + partial 128-wide block). ------
    Bm, Hm, Im = 200, 2304, 1152
    Sm = jax.random.normal(k_med_s, (Bm, Hm), dtype=jnp.float32)
    Dm = jax.random.normal(k_med_d, (Hm, Im), dtype=jnp.float32).astype(jnp.bfloat16)

    Xm = sparse_coding_forward(Sm, Dm, use_bias=False)  # bf16 compute (default)
    Xm = jax.block_until_ready(Xm)
    Xm_ref = jnp.dot(
        Sm.astype(jnp.bfloat16).astype(jnp.float32),
        Dm.astype(jnp.float32),
        precision=jax.lax.Precision.HIGHEST,
    )
    assert Xm.shape == (Bm, Im)
    assert jnp.allclose(Xm, Xm_ref, atol=1e-2, rtol=1e-2), "medium bf16 mismatch"

    print("KERNEL_OK")
</pallas_src>

<mosaic_0001>
module attributes {stable_mosaic.version = 11 : i64} {
  func.func @_sc_single_kernel_bias(%arg0: i32, %arg1: i32, %arg2: memref<8x32xf32, #tpu.memory_space<vmem>>, %arg3: memref<32x64xf32, #tpu.memory_space<vmem>>, %arg4: memref<1x64xf32, #tpu.memory_space<vmem>>, %arg5: memref<8x64xf32, #tpu.memory_space<vmem>>) attributes {dimension_semantics = [#tpu.dimension_semantics<parallel>, #tpu.dimension_semantics<parallel>], iteration_bounds = array<i64: 1, 1>, scalar_prefetch = 0 : i64, scratch_operands = 0 : i64, tpu.core_type = #tpu.core_type<tc>, window_params = [{transform_indices = @transform_0, window_bounds = array<i64: 8, 32>}, {transform_indices = @transform_1, window_bounds = array<i64: 32, 64>}, {transform_indices = @transform_2, window_bounds = array<i64: 1, 64>}, {transform_indices = @transform_3, window_bounds = array<i64: 8, 64>}]} {
    %c0 = arith.constant 0 : index
    %c0_0 = arith.constant 0 : index
    %0 = vector.load %arg2[%c0, %c0_0] : memref<8x32xf32, #tpu.memory_space<vmem>>, vector<8x32xf32>
    %c0_1 = arith.constant 0 : index
    %c0_2 = arith.constant 0 : index
    %1 = vector.load %arg3[%c0_1, %c0_2] : memref<32x64xf32, #tpu.memory_space<vmem>>, vector<32x64xf32>
    %cst = arith.constant dense<0.000000e+00> : vector<8x64xf32>
    %2 = tpu.matmul %0, %1, %cst {dimension_numbers = #tpu.dot_dimension_numbers<[1], [0], [0], [1], [0, 0, 1, 1], [], []>} : vector<8x32xf32>, vector<32x64xf32>, vector<8x64xf32> -> vector<8x64xf32>
    %c0_3 = arith.constant 0 : index
    %c0_4 = arith.constant 0 : index
    %3 = vector.load %arg4[%c0_3, %c0_4] : memref<1x64xf32, #tpu.memory_space<vmem>>, vector<1x64xf32>
    %4 = vector.broadcast %3 : vector<1x64xf32> to vector<8x64xf32>
    %5 = arith.addf %2, %4 : vector<8x64xf32>
    %c0_5 = arith.constant 0 : index
    %c0_6 = arith.constant 0 : index
    %6 = vector.load %arg5[%c0_5, %c0_6] : memref<8x64xf32, #tpu.memory_space<vmem>>, vector<8x64xf32>
    tpu.vector_store %arg5[%c0_5, %c0_6], %5 {strides = array<i32>} : memref<8x64xf32, #tpu.memory_space<vmem>>, vector<8x64xf32>,
    return
  }
  func.func @transform_0(%arg0: i32, %arg1: i32) -> (i32, i32) {
    %c0_i32 = arith.constant 0 : i32
    %c0_i32_0 = arith.constant 0 : i32
    return %arg0, %c0_i32 : i32, i32
  }
  func.func @transform_1(%arg0: i32, %arg1: i32) -> (i32, i32) {
    %c0_i32 = arith.constant 0 : i32
    %c0_i32_0 = arith.constant 0 : i32
    return %c0_i32, %arg1 : i32, i32
  }
  func.func @transform_2(%arg0: i32, %arg1: i32) -> (i32, i32) {
    %c0_i32 = arith.constant 0 : i32
    %c0_i32_0 = arith.constant 0 : i32
    return %c0_i32, %arg1 : i32, i32
  }
  func.func @transform_3(%arg0: i32, %arg1: i32) -> (i32, i32) {
    %c0_i32 = arith.constant 0 : i32
    return %arg0, %arg1 : i32, i32
  }
}

</mosaic_0001>

<llo_original>
// kernel: sparse_coding_forward.1
$region0: #{sparse_coding_forward.1}
  #allocation0 [shape = 'u32[]', space=smem, size = 0x4, offset = 0x4, fixed_abs, tag = 'smem constant byte address 0x4 - core index']
  #allocation1 [shape = 'u32[72,128]{1,0:T(1,128)}', space=vmem, size = 0x9000, scoped, tag = 'internal scratch']
  %s0 = inlined_call_operand.hbm [shape: f32[8,32], index: 0, kind: input, shape index: {}]
  %s1 = inlined_call_operand.hbm [shape: f32[32,64], index: 1, kind: input, shape index: {}]
  %s2 = inlined_call_operand.vmem [shape: f32[1,64], index: 2, kind: input, shape index: {}]
  %s3 = inlined_call_operand.hbm [shape: f32[8,64], index: 3, kind: output, shape index: {}]
  %s4 = sld [smem:[#allocation0]]
  $region30: #{sparse_coding_forward.1} parent=0
    _
  %s6 = ssub.s32 1, %s4
  %s7 = scalar_select 0, %s6, %s4
  $region1: #{sparse_coding_forward.1} parent=0
    #allocation2 [shape = 'u8[4096]{0}', space=vmem, size = 0x1000, scoped, tag = 'input window, operand 0, single buffered']
    #allocation3 [shape = 's32[1]{0}', space=sflag, size = 0x4, scoped, tag = 'scoped memory for sparse_coding_forward.1']
    #allocation4 [shape = 's32[1]{0}', space=sflag, size = 0x4, scoped, tag = 'scoped memory for sparse_coding_forward.1']
    #allocation5 [shape = 'u8[16384]{0}', space=vmem, size = 0x4000, scoped, tag = 'input window, operand 1, single buffered']
    #allocation6 [shape = 's32[1]{0}', space=sflag, size = 0x4, scoped, tag = 'scoped memory for sparse_coding_forward.1']
    #allocation7 [shape = 'u8[4096]{0}', space=vmem, size = 0x1000, scoped, tag = 'output window, operand 0, single buffered']
    %8 = vsyncpa [#allocation3], 0
    %9 = vsyncpa [#allocation6], 0
    %10 = vsyncpa [#allocation4], 0
    // Predicated region
    $region2: #{sparse_coding_forward.1} parent=1 // pred_check
      _
    $region3: #{sparse_coding_forward.1} parent=1 // pred_check_branch
      %12 = sbr.rel (0) target = $region5
    $region4: #{sparse_coding_forward.1} parent=1 // pred_region
      %14 = vsyncadd [#allocation3], 0
      %s16 = sshll.u32 %s0, 4
      %s17 = int_to_ptr.hbm [resolvable:$true] %s16
      %s18 = sshll.u32 [#allocation2], 4
      %s19 = int_to_ptr.vmem [resolvable:$true] %s18
      %21 = dma.hbm_to_vmem [thread:$0]  %s17, 128, %s19, [#allocation3]
    $region5: #{sparse_coding_forward.1} parent=1 // pred_fallthru
      _
    // Predicated region
    $region6: #{sparse_coding_forward.1} parent=1 // pred_check
      _
    $region7: #{sparse_coding_forward.1} parent=1 // pred_check_branch
      %23 = sbr.rel (0) target = $region9
    $region8: #{sparse_coding_forward.1} parent=1 // pred_region
      %25 = vsyncadd [#allocation6], 0
      %s26 = sshll.u32 %s1, 4
      %s27 = int_to_ptr.hbm [resolvable:$true] %s26
      %s28 = sshll.u32 [#allocation5], 4
      %s29 = int_to_ptr.vmem [resolvable:$true] %s28
      %34 = dma.hbm_to_vmem [thread:$0]  %s27, 512, %s29, [#allocation6], 128, 128, 8
    $region9: #{sparse_coding_forward.1} parent=1 // pred_fallthru
      _
    // Predicated region
    $region10: #{sparse_coding_forward.1} parent=1 // pred_check
      _
    $region11: #{sparse_coding_forward.1} parent=1 // pred_check_branch
      %36 = sbr.rel (0) target = $region13
    $region12: #{sparse_coding_forward.1} parent=1 // pred_region
      _
    $region13: #{sparse_coding_forward.1} parent=1 // pred_fallthru
      _
    // Predicated region
    $region14: #{sparse_coding_forward.1} parent=1 // pred_check
      _
    $region15: #{sparse_coding_forward.1} parent=1 // pred_check_branch
      %38 = sbr.rel (0) target = $region17
    $region16: #{sparse_coding_forward.1} parent=1 // pred_region
      %40 = dma.done [#allocation3], 128
    $region17: #{sparse_coding_forward.1} parent=1 // pred_fallthru
      _
    // Predicated region
    $region18: #{sparse_coding_forward.1} parent=1 // pred_check
      _
    $region19: #{sparse_coding_forward.1} parent=1 // pred_check_branch
      %42 = sbr.rel (0) target = $region21
    $region20: #{sparse_coding_forward.1} parent=1 // pred_region
      %44 = dma.done [#allocation6], 512
    $region21: #{sparse_coding_forward.1} parent=1 // pred_fallthru
      _
    %v45 = vld [vmem:[#allocation2] sm:$0xff]
    %v46 = vld [vmem:[#allocation5] sm:$0xff]
    %v47 = vld [vmem:[#allocation5 + $0x8] sm:$0xff]
    %v48 = vld [vmem:[#allocation5 + $0x10] sm:$0xff]
    %v49 = vld [vmem:[#allocation5 + $0x18] sm:$0xff]
    %v50 = vld [vmem:[%s2] sm:$0x1]
    %v52 = vperm.slane %v50, 0
    %vm54 = vcmask 261120
    %v56 = vsel %vm54, %v45, 0
    %58 = vmatpush.msra.mxu0 0.0
    %59 = vmatpush.msra.mxu0 0.0
    %60 = vmatpush.msra.mxu0 0.0
    %61 = vmatpush.msra.mxu0 0.0
    %62 = vmatpush.msra.mxu0 0.0
    %63 = vmatpush.msra.mxu0 0.0
    %64 = vmatpush.msra.mxu0 0.0
    %65 = vmatpush.msra.mxu0 0.0
    %66 = vmatpush.msra.mxu0 0.0
    %67 = vmatpush.msra.mxu0 0.0
    %68 = vmatpush.msra.mxu0 0.0
    %69 = vmatpush.msra.mxu0 0.0
    %70 = vmatpush.msra.mxu0 %v49
    %71 = vmatpush.msra.mxu0 %v48
    %72 = vmatpush.msra.mxu0 %v47
    %73 = vmatpush.msra.mxu0 %v46
    %74 = vmatmul.f32.gmra.mxu0 %v56
    %v75 = vpop.f32.mrf.mxu0
    %v76 = vadd.f32 %v52, %v75
    %77 = vdwg.mxu0
    %vm78 = vcmask 523264
    %79 = vst.msk [vmem:[#allocation7] sm:$0xff] %vm78, %v76
    // Predicated region
    $region22: #{sparse_coding_forward.1} parent=1 // pred_check
      _
    $region23: #{sparse_coding_forward.1} parent=1 // pred_check_branch
      %81 = sbr.rel (0) target = $region25
    $region24: #{sparse_coding_forward.1} parent=1 // pred_region
      %83 = vsyncadd [#allocation4], 0
      %s85 = sshll.u32 [#allocation7], 4
      %s86 = int_to_ptr.vmem [resolvable:$true] %s85
      %s87 = sshll.u32 %s3, 4
      %s88 = int_to_ptr.hbm [resolvable:$true] %s87
      %90 = dma.vmem_to_hbm [thread:$0]  %s86, 128, %s88, [#allocation4]
    $region25: #{sparse_coding_forward.1} parent=1 // pred_fallthru
      _
    // Predicated region
    $region26: #{sparse_coding_forward.1} parent=1 // pred_check
      _
    $region27: #{sparse_coding_forward.1} parent=1 // pred_check_branch
      %92 = sbr.rel (0) target = $region29
    $region28: #{sparse_coding_forward.1} parent=1 // pred_region
      %94 = dma.done [#allocation4], 128
    $region29: #{sparse_coding_forward.1} parent=1 // pred_fallthru
      _
    %95 = vsyncpa [#allocation3], 1
    %96 = vsyncpa [#allocation6], 1
    %97 = vsyncpa [#allocation4], 1

</llo_original>
